<compile_context>
chip_gen: v7x
topology: tpu7x:2x2x1
jax: 0.10.0
libtpu: 0.0.40
codegen_flags: <defaults>
</compile_context>

<pallas_src>
import functools

import jax
import jax.numpy as jnp
from jax.experimental import pallas as pl
from jax.experimental.pallas import tpu as pltpu

PAD = 128       # lane-dense feature width used for the hidden layers
MIN_TILE = 128  # minimum (sublane-aligned) batch tile


def mlp_kernel(x_ref, w_in_ref, b_in_ref, w_hid_ref, b_hid_ref,
               w_out_ref, b_out_ref, o_ref):
    """x_ref:     [tile_b, 66]   f32  batch tile (cast to bf16 in-kernel)
       w_in_ref:  [66, 128]      bf16 layer-1 weight (BN folded)
       b_in_ref:  [1, 128]       f32  layer-1 bias   (BN folded)
       w_hid_ref: [2, 128, 128]  bf16 layers 2-3 weights (BN folded, padded)
       b_hid_ref: [2, 1, 128]    f32  layers 2-3 biases
       w_out_ref: [1, 128]       bf16 final weight (column 0, transposed)
       b_out_ref: [1, 1]         f32  final bias
       o_ref:     [1, 1, tile_b] f32  lane-dense output row."""
    # Layer 1: Linear(66->128)+BN(folded) + ReLU.  K=66: Mosaic masks the
    # padding lanes of the contraction, so no feature padding is needed.
    x = x_ref[...].astype(jnp.bfloat16)
    y = jnp.dot(x, w_in_ref[...], preferred_element_type=jnp.float32) + b_in_ref[...]
    h = jnp.maximum(y, 0.0).astype(jnp.bfloat16)          # Dropout(eval) = id

    # Layers 2-3: Linear(+BN folded) + ReLU on padded 128-wide features.
    for l in range(w_hid_ref.shape[0]):
        y = jnp.dot(h, w_hid_ref[l], preferred_element_type=jnp.float32) + b_hid_ref[l]
        h = jnp.maximum(y, 0.0).astype(jnp.bfloat16)

    # Final layer (output_dim == 1): NT mat-vec -> lane-dense [1, tile_b] row.
    out_row = jax.lax.dot_general(
        w_out_ref[...], h,
        dimension_numbers=(((1,), (1,)), ((), ())),
        preferred_element_type=jnp.float32) + b_out_ref[...]
    o_ref[...] = out_row.reshape(o_ref.shape)


def make_params(key, input_dim=66, hidden_dims=(128, 128, 64), output_dim=1,
                eps=1e-5):
    """Mimics MLPNet.init_weight(): kaiming-normal (fan_in, relu) linear
    weights, zero biases, BN gamma=1, beta=0, running_mean=0, running_var=1."""
    dims = [input_dim, *hidden_dims, output_dim]
    params = []
    for i in range(len(dims) - 1):
        fan_in, fan_out = dims[i], dims[i + 1]
        key, wk = jax.random.split(key)
        std = (2.0 / fan_in) ** 0.5
        w = jax.random.normal(wk, (fan_in, fan_out), jnp.float32) * std  # [in,out]
        b = jnp.zeros((1, fan_out), jnp.float32)
        params.append((w, b))

    bn_params = []
    for h in hidden_dims:
        gamma = jnp.ones((1, h), jnp.float32)
        beta = jnp.zeros((1, h), jnp.float32)
        running_mean = jnp.zeros((1, h), jnp.float32)
        running_var = jnp.ones((1, h), jnp.float32)
        scale = gamma / jnp.sqrt(running_var + eps)
        shift = beta - running_mean * scale
        bn_params.append((scale, shift))
    return params, bn_params


def _pad_to(a, shape):
    return jnp.pad(a, [(0, t - s) for s, t in zip(a.shape, shape)])


def pack_params(params, bn_params, pad=PAD):
    """Fold eval-mode BatchNorm into the Linear layers, pad hidden dims to a
    lane-dense 128, and lay out the final (out_dim=1) layer as a [1,128] row."""
    folded = []
    for i, (w, b) in enumerate(params):
        if i < len(bn_params):
            scale, shift = bn_params[i]          # [1, out]
            w = w * scale                        # broadcasts over input rows
            b = b * scale + shift
        folded.append((w, b))

    # Layer 0: keep the true input width (66); pad only the output dim.
    w0, b0 = folded[0]
    w_in = _pad_to(w0, (w0.shape[0], pad)).astype(jnp.bfloat16)     # [66, 128]
    b_in = _pad_to(b0, (1, pad)).astype(jnp.float32)                # [1, 128]

    # Hidden layers 1..n-2: pad both dims to 128 and stack (VMEM resident).
    ws, bs = [], []
    for w, b in folded[1:-1]:
        ws.append(_pad_to(w, (pad, pad)))
        bs.append(_pad_to(b, (1, pad)))
    w_hid = jnp.stack(ws).astype(jnp.bfloat16)                      # [L-2,128,128]
    b_hid = jnp.stack(bs).astype(jnp.float32)                       # [L-2,1,128]

    # Final layer: specialised to output_dim == 1 (lane-dense mat-vec output).
    w_last, b_last = folded[-1]
    assert w_last.shape[1] == 1, "kernel specialises the final layer to output_dim=1"
    w_out = _pad_to(w_last, (pad, 1)).T.astype(jnp.bfloat16)        # [1, 128]
    b_out = b_last.astype(jnp.float32)                              # [1, 1]
    return w_in, b_in, w_hid, b_hid, w_out, b_out


def _pick_tile(batch, tile_b):
    """Pick a sublane-aligned batch tile <= tile_b that keeps the grid length
    >= 2 when the batch allows (so v7x's two TensorCores both get work)."""
    tile_b = max(MIN_TILE, (tile_b // MIN_TILE) * MIN_TILE)
    half = -(-batch // (2 * MIN_TILE)) * MIN_TILE     # ceil(batch/2) -> 128-mult
    return min(tile_b, max(MIN_TILE, half))


@functools.partial(jax.jit, static_argnames=("tile_b",))
def mlp_forward(x, w_in, b_in, w_hid, b_hid, w_out, b_out, tile_b=512):
    B, D = x.shape
    tile = _pick_tile(B, tile_b)
    num_tiles = pl.cdiv(B, tile)
    b_pad = num_tiles * tile
    x_p = x if b_pad == B else jnp.pad(x, ((0, b_pad - B), (0, 0)))

    n_hid = w_hid.shape[0]
    flops = 2 * b_pad * (D * PAD + n_hid * PAD * PAD + PAD)
    bytes_accessed = (b_pad * D * 4                                  # x read
                      + (w_in.size + w_hid.size + w_out.size) * 2    # bf16 weights
                      + (b_in.size + b_hid.size + b_out.size) * 4    # f32 biases
                      + b_pad * 4)                                   # output write

    out = pl.pallas_call(
        mlp_kernel,
        out_shape=jax.ShapeDtypeStruct((num_tiles, 1, tile), jnp.float32),
        grid=(num_tiles,),
        in_specs=[
            pl.BlockSpec((tile, D), lambda i: (i, 0)),         # x batch tile
            pl.BlockSpec(w_in.shape, lambda i: (0, 0)),        # resident params
            pl.BlockSpec(b_in.shape, lambda i: (0, 0)),
            pl.BlockSpec(w_hid.shape, lambda i: (0, 0, 0)),
            pl.BlockSpec(b_hid.shape, lambda i: (0, 0, 0)),
            pl.BlockSpec(w_out.shape, lambda i: (0, 0)),
            pl.BlockSpec(b_out.shape, lambda i: (0, 0)),
        ],
        out_specs=pl.BlockSpec((1, 1, tile), lambda i: (i, 0, 0)),
        compiler_params=pltpu.CompilerParams(
            dimension_semantics=("parallel",)),                # megacore on v7x
        cost_estimate=pl.CostEstimate(flops=flops, transcendentals=0,
                                      bytes_accessed=bytes_accessed),
    )(x_p, w_in, b_in, w_hid, b_hid, w_out, b_out)

    return out.reshape(b_pad)[:B].reshape(B, 1)


def mlp_reference_packed(x, w_in, b_in, w_hid, b_hid, w_out, b_out):
    """Plain-JAX reference using the identical folded/padded/bf16 parameters."""
    h = x.astype(jnp.bfloat16)
    y = jnp.dot(h, w_in, preferred_element_type=jnp.float32) + b_in
    h = jnp.maximum(y, 0.0).astype(jnp.bfloat16)
    for l in range(w_hid.shape[0]):
        y = jnp.dot(h, w_hid[l], preferred_element_type=jnp.float32) + b_hid[l]
        h = jnp.maximum(y, 0.0).astype(jnp.bfloat16)
    out = jax.lax.dot_general(w_out, h, dimension_numbers=(((1,), (1,)), ((), ())),
                              preferred_element_type=jnp.float32) + b_out
    return out.T                                               # [B, 1]


def mlp_reference_f32(x, params, bn_params):
    """Exact f32 forward of the original module in eval mode."""
    h = x
    for i, (w, b) in enumerate(params[:-1]):
        scale, shift = bn_params[i]
        h = jnp.maximum((h @ w + b) * scale + shift, 0.0)
    w, b = params[-1]
    return h @ w + b


if __name__ == "__main__":
    key = jax.random.PRNGKey(0)
    pkey, xkey = jax.random.split(key)

    B, INPUT_DIM, OUTPUT_DIM = 200, 66, 1      # non-multiple of tile -> padding path
    params, bn_params = make_params(pkey, input_dim=INPUT_DIM,
                                    output_dim=OUTPUT_DIM)
    x = jax.random.normal(xkey, (B, INPUT_DIM), jnp.float32)

    packed = pack_params(params, bn_params)

    out = mlp_forward(x, *packed, tile_b=512)
    out = jax.block_until_ready(out)
    assert out.shape == (B, OUTPUT_DIM)

    # Tight check vs. a plain-JAX path with the same folded/padded bf16 params.
    ref_packed = mlp_reference_packed(x, *packed)
    assert jnp.allclose(out, ref_packed, atol=1e-2, rtol=1e-2)

    # Loose check vs. the exact f32 forward of the original module
    # (the only difference is the bf16 cast of the matmul operands).
    ref_f32 = mlp_reference_f32(x, params, bn_params)
    assert jnp.allclose(out, ref_f32, atol=1e-1, rtol=1e-1)

    print("KERNEL_OK")
</pallas_src>

<mosaic_0001>
module attributes {stable_mosaic.version = 11 : i64} {
  func.func @mlp_kernel(%arg0: i32, %arg1: memref<128x66xf32, #tpu.memory_space<vmem>>, %arg2: memref<66x128xbf16, #tpu.memory_space<vmem>>, %arg3: memref<1x128xf32, #tpu.memory_space<vmem>>, %arg4: memref<2x128x128xbf16, #tpu.memory_space<vmem>>, %arg5: memref<2x1x128xf32, #tpu.memory_space<vmem>>, %arg6: memref<1x128xbf16, #tpu.memory_space<vmem>>, %arg7: memref<1x1xf32, #tpu.memory_space<vmem>>, %arg8: memref<1x1x128xf32, #tpu.memory_space<vmem>>) attributes {dimension_semantics = [#tpu.dimension_semantics<parallel>], iteration_bounds = array<i64: 2>, scalar_prefetch = 0 : i64, scratch_operands = 0 : i64, tpu.core_type = #tpu.core_type<tc>, window_params = [{transform_indices = @transform_0, window_bounds = array<i64: 128, 66>}, {pipeline_mode = #tpu.pipeline_mode<synchronous>, transform_indices = @transform_1, window_bounds = array<i64: 66, 128>}, {pipeline_mode = #tpu.pipeline_mode<synchronous>, transform_indices = @transform_2, window_bounds = array<i64: 1, 128>}, {pipeline_mode = #tpu.pipeline_mode<synchronous>, transform_indices = @transform_3, window_bounds = array<i64: 2, 128, 128>}, {pipeline_mode = #tpu.pipeline_mode<synchronous>, transform_indices = @transform_4, window_bounds = array<i64: 2, 1, 128>}, {pipeline_mode = #tpu.pipeline_mode<synchronous>, transform_indices = @transform_5, window_bounds = array<i64: 1, 128>}, {pipeline_mode = #tpu.pipeline_mode<synchronous>, transform_indices = @transform_6, window_bounds = array<i64: 1, 1>}, {transform_indices = @transform_7, window_bounds = array<i64: 1, 1, 128>}]} {
    %c0 = arith.constant 0 : index
    %c0_0 = arith.constant 0 : index
    %0 = vector.load %arg1[%c0, %c0_0] : memref<128x66xf32, #tpu.memory_space<vmem>>, vector<128x66xf32>
    %1 = arith.truncf %0 : vector<128x66xf32> to vector<128x66xbf16>
    %c0_1 = arith.constant 0 : index
    %c0_2 = arith.constant 0 : index
    %2 = vector.load %arg2[%c0_1, %c0_2] : memref<66x128xbf16, #tpu.memory_space<vmem>>, vector<66x128xbf16>
    %cst = arith.constant dense<0.000000e+00> : vector<128x128xf32>
    %3 = tpu.matmul %1, %2, %cst {dimension_numbers = #tpu.dot_dimension_numbers<[1], [0], [0], [1], [0, 0, 1, 1], [], []>} : vector<128x66xbf16>, vector<66x128xbf16>, vector<128x128xf32> -> vector<128x128xf32>
    %c0_3 = arith.constant 0 : index
    %c0_4 = arith.constant 0 : index
    %4 = vector.load %arg3[%c0_3, %c0_4] : memref<1x128xf32, #tpu.memory_space<vmem>>, vector<1x128xf32>
    %5 = vector.broadcast %4 : vector<1x128xf32> to vector<128x128xf32>
    %6 = arith.addf %3, %5 : vector<128x128xf32>
    %cst_5 = arith.constant 0.000000e+00 : f32
    %7 = vector.broadcast %cst_5 : f32 to vector<128x128xf32>
    %8 = arith.maximumf %6, %7 : vector<128x128xf32>
    %9 = arith.truncf %8 : vector<128x128xf32> to vector<128x128xbf16>
    %c0_6 = arith.constant 0 : index
    %c0_7 = arith.constant 0 : index
    %c0_8 = arith.constant 0 : index
    %10 = vector.load %arg4[%c0_6, %c0_7, %c0_8] : memref<2x128x128xbf16, #tpu.memory_space<vmem>>, vector<1x128x128xbf16>
    %11 = vector.shape_cast %10 : vector<1x128x128xbf16> to vector<128x128xbf16>
    %cst_9 = arith.constant dense<0.000000e+00> : vector<128x128xf32>
    %12 = tpu.matmul %9, %11, %cst_9 {dimension_numbers = #tpu.dot_dimension_numbers<[1], [0], [0], [1], [0, 0, 1, 1], [], []>} : vector<128x128xbf16>, vector<128x128xbf16>, vector<128x128xf32> -> vector<128x128xf32>
    %c0_10 = arith.constant 0 : index
    %c0_11 = arith.constant 0 : index
    %c0_12 = arith.constant 0 : index
    %13 = vector.load %arg5[%c0_10, %c0_11, %c0_12] : memref<2x1x128xf32, #tpu.memory_space<vmem>>, vector<1x1x128xf32>
    %14 = vector.shape_cast %13 : vector<1x1x128xf32> to vector<1x128xf32>
    %15 = vector.broadcast %14 : vector<1x128xf32> to vector<128x128xf32>
    %16 = arith.addf %12, %15 : vector<128x128xf32>
    %cst_13 = arith.constant 0.000000e+00 : f32
    %17 = vector.broadcast %cst_13 : f32 to vector<128x128xf32>
    %18 = arith.maximumf %16, %17 : vector<128x128xf32>
    %19 = arith.truncf %18 : vector<128x128xf32> to vector<128x128xbf16>
    %c1 = arith.constant 1 : index
    %c0_14 = arith.constant 0 : index
    %c0_15 = arith.constant 0 : index
    %20 = vector.load %arg4[%c1, %c0_14, %c0_15] : memref<2x128x128xbf16, #tpu.memory_space<vmem>>, vector<1x128x128xbf16>
    %21 = vector.shape_cast %20 : vector<1x128x128xbf16> to vector<128x128xbf16>
    %cst_16 = arith.constant dense<0.000000e+00> : vector<128x128xf32>
    %22 = tpu.matmul %19, %21, %cst_16 {dimension_numbers = #tpu.dot_dimension_numbers<[1], [0], [0], [1], [0, 0, 1, 1], [], []>} : vector<128x128xbf16>, vector<128x128xbf16>, vector<128x128xf32> -> vector<128x128xf32>
    %c1_17 = arith.constant 1 : index
    %c0_18 = arith.constant 0 : index
    %c0_19 = arith.constant 0 : index
    %23 = vector.load %arg5[%c1_17, %c0_18, %c0_19] : memref<2x1x128xf32, #tpu.memory_space<vmem>>, vector<1x1x128xf32>
    %24 = vector.shape_cast %23 : vector<1x1x128xf32> to vector<1x128xf32>
    %25 = vector.broadcast %24 : vector<1x128xf32> to vector<128x128xf32>
    %26 = arith.addf %22, %25 : vector<128x128xf32>
    %cst_20 = arith.constant 0.000000e+00 : f32
    %27 = vector.broadcast %cst_20 : f32 to vector<128x128xf32>
    %28 = arith.maximumf %26, %27 : vector<128x128xf32>
    %29 = arith.truncf %28 : vector<128x128xf32> to vector<128x128xbf16>
    %c0_21 = arith.constant 0 : index
    %c0_22 = arith.constant 0 : index
    %30 = vector.load %arg6[%c0_21, %c0_22] : memref<1x128xbf16, #tpu.memory_space<vmem>>, vector<1x128xbf16>
    %cst_23 = arith.constant dense<0.000000e+00> : vector<1x128xf32>
    %31 = tpu.matmul %30, %29, %cst_23 {dimension_numbers = #tpu.dot_dimension_numbers<[1], [1], [0], [0], [0, 0, 1, 0], [], []>} : vector<1x128xbf16>, vector<128x128xbf16>, vector<1x128xf32> -> vector<1x128xf32>
    %c0_24 = arith.constant 0 : index
    %c0_25 = arith.constant 0 : index
    %32 = vector.load %arg7[%c0_24, %c0_25] : memref<1x1xf32, #tpu.memory_space<vmem>>, vector<1x1xf32>
    %33 = vector.broadcast %32 : vector<1x1xf32> to vector<1x128xf32>
    %34 = arith.addf %31, %33 : vector<1x128xf32>
    %35 = vector.shape_cast %34 : vector<1x128xf32> to vector<1x1x128xf32>
    %c0_26 = arith.constant 0 : index
    %c0_27 = arith.constant 0 : index
    %c0_28 = arith.constant 0 : index
    %36 = vector.load %arg8[%c0_26, %c0_27, %c0_28] : memref<1x1x128xf32, #tpu.memory_space<vmem>>, vector<1x1x128xf32>
    tpu.vector_store %arg8[%c0_26, %c0_27, %c0_28], %35 {strides = array<i32>} : memref<1x1x128xf32, #tpu.memory_space<vmem>>, vector<1x1x128xf32>,
    return
  }
  func.func @transform_0(%arg0: i32) -> (i32, i32) {
    %c0_i32 = arith.constant 0 : i32
    %c0_i32_0 = arith.constant 0 : i32
    return %arg0, %c0_i32 : i32, i32
  }
  func.func @transform_1(%arg0: i32) -> (i32, i32) {
    %c0_i32 = arith.constant 0 : i32
    %c0_i32_0 = arith.constant 0 : i32
    %c0_i32_1 = arith.constant 0 : i32
    return %c0_i32, %c0_i32_0 : i32, i32
  }
  func.func @transform_2(%arg0: i32) -> (i32, i32) {
    %c0_i32 = arith.constant 0 : i32
    %c0_i32_0 = arith.constant 0 : i32
    %c0_i32_1 = arith.constant 0 : i32
    return %c0_i32, %c0_i32_0 : i32, i32
  }
  func.func @transform_3(%arg0: i32) -> (i32, i32, i32) {
    %c0_i32 = arith.constant 0 : i32
    %c0_i32_0 = arith.constant 0 : i32
    %c0_i32_1 = arith.constant 0 : i32
    %c0_i32_2 = arith.constant 0 : i32
    return %c0_i32, %c0_i32_0, %c0_i32_1 : i32, i32, i32
  }
  func.func @transform_4(%arg0: i32) -> (i32, i32, i32) {
    %c0_i32 = arith.constant 0 : i32
    %c0_i32_0 = arith.constant 0 : i32
    %c0_i32_1 = arith.constant 0 : i32
    %c0_i32_2 = arith.constant 0 : i32
    return %c0_i32, %c0_i32_0, %c0_i32_1 : i32, i32, i32
  }
  func.func @transform_5(%arg0: i32) -> (i32, i32) {
    %c0_i32 = arith.constant 0 : i32
    %c0_i32_0 = arith.constant 0 : i32
    %c0_i32_1 = arith.constant 0 : i32
    return %c0_i32, %c0_i32_0 : i32, i32
  }
  func.func @transform_6(%arg0: i32) -> (i32, i32) {
    %c0_i32 = arith.constant 0 : i32
    %c0_i32_0 = arith.constant 0 : i32
    %c0_i32_1 = arith.constant 0 : i32
    return %c0_i32, %c0_i32_0 : i32, i32
  }
  func.func @transform_7(%arg0: i32) -> (i32, i32, i32) {
    %c0_i32 = arith.constant 0 : i32
    %c0_i32_0 = arith.constant 0 : i32
    %c0_i32_1 = arith.constant 0 : i32
    return %arg0, %c0_i32, %c0_i32_0 : i32, i32, i32
  }
}

</mosaic_0001>

<llo_original>
// kernel: mlp_forward.1
$region0: #{mlp_forward.1}
  #allocation0 [shape = 'u32[]', space=smem, size = 0x4, offset = 0x4, fixed_abs, tag = 'smem constant byte address 0x4 - core index']
  #allocation1 [shape = 'u32[144,128]{1,0:T(1,128)}', space=vmem, size = 0x12000, scoped, tag = 'internal scratch']
  #allocation2 [shape = 'f32[1,1]{1,0:T(1,128)S(1)}', space=vmem, size = 0x200, scoped, tag = 'scoped memory for mlp_forward.1']
  %s0 = inlined_call_operand.vmem [shape: f32[256,66], index: 0, kind: input, shape index: {}]
  %s1 = inlined_call_operand.vmem [shape: bf16[66,128], index: 1, kind: input, shape index: {}]
  %s2 = inlined_call_operand.vmem [shape: f32[1,128], index: 2, kind: input, shape index: {}]
  %s3 = inlined_call_operand.vmem [shape: bf16[2,128,128], index: 3, kind: input, shape index: {}]
  %s4 = inlined_call_operand.vmem [shape: f32[2,1,128], index: 4, kind: input, shape index: {}]
  %s5 = inlined_call_operand.vmem [shape: bf16[1,128], index: 5, kind: input, shape index: {}]
  %s6 = inlined_call_operand.<no memory space> [shape: f32[1,1], index: 6, kind: input, shape index: {}]
  %s7 = inlined_call_operand.hbm [shape: f32[2,1,128], index: 7, kind: output, shape index: {}]
  %s8 = sld [smem:[#allocation0]]
  $region61: #{mlp_forward.1} parent=0
    _
  %s10 = ssub.s32 1, %s8
  %s11 = scalar_select 0, %s10, %s8
  %v12 = vstv %s6
  %13 = vst [vmem:[#allocation2] sm:$0x1] %v12
  $region1: #{mlp_forward.1} parent=0
    #allocation3 [shape = 'u8[1024]{0}', space=vmem, size = 0x400, scoped, tag = 'output window, operand 0']
    #allocation4 [shape = 's32[2]{0}', space=sflag, size = 0x8, scoped, tag = 'scoped memory for mlp_forward.1']
    %14 = vsyncpa [#allocation4], 0
    %s15 = scalar_lea.sflag [#allocation4], 1
    %16 = vsyncpa %s15, 0
    loop: start=0, step=1, limit=4
    $region2: #{mlp_forward.1} parent=1 // loop_pre_header
      _
    $region3: #{mlp_forward.1} parent=1 // loop_header
      %s18 = sphi 0, %s22
      %p19 = scmp.ge.s32.totalorder %s18, 4
      %s28 = sphi 0, %s30
      %s31 = sphi 0, %s28
      %s32 = sphi 0, %s31
      %s48 = sphi 0, %s32
      %s52 = sphi 0, %s52
      %s54 = sphi 0, %s52
      %s55 = sphi 0, %s54
      %s69 = sphi 0, %s55
      %s73 = sphi 0, %s73
      %s75 = sphi 0, %s73
      %s76 = sphi 0, %s75
      %s90 = sphi 0, %s76
      %s94 = sphi 0, %s94
      %s96 = sphi 0, %s94
      %s97 = sphi 0, %s96
      %s111 = sphi 0, %s97
      %s115 = sphi 0, %s115
      %s117 = sphi 0, %s115
      %s118 = sphi 0, %s117
      %s132 = sphi 0, %s118
      %s136 = sphi 0, %s136
      %s138 = sphi 0, %s136
      %s139 = sphi 0, %s138
      %s153 = sphi 0, %s139
      %s157 = sphi 0, %s157
      %s159 = sphi 0, %s157
      %s160 = sphi 0, %s159
      %s174 = sphi 0, %s160
      %s180 = sphi 0, %s182
      %s183 = sphi 0, %s180
      %s184 = sphi 0, %s183
      %s200 = sphi 0, %s184
    $region4: #{mlp_forward.1} parent=1 // loop_header_branch
      %21 = sbr.rel (%p19) target = $region8
    $region5: #{mlp_forward.1} parent=1 // loop_body
      %s23 = ssub.s32 %s18, 1
      %s24 = ssub.s32 %s18, 2
      %s25 = sadd.s32 %s18, 1
      %s26 = ssub.s32 %s18, %s25
      %p27 = scmp.eq.s32.totalorder %s26, 0
      %s29 = sadd.s32 %s28, 1
      %s30 = scalar_select %p27, %s28, %s29
      %p33 = pneg %p27
      %p34 = scmp.eq.s32.totalorder %s18, 1
      %p35 = por %p33, %p34
      %p36 = scmp.ne.s32.totalorder %s28, %s31
      %p37 = scmp.eq.s32.totalorder %s18, 0
      %p38 = por %p36, %p37
      %p39 = scmp.ne.s32.totalorder %s28, %s31
      %p40 = scmp.eq.s32.totalorder %s23, 1
      %p41 = por %p39, %p40
      %p42 = scmp.ne.s32.totalorder %s31, %s32
      %p43 = scmp.eq.s32.totalorder %s23, 0
      %p44 = por %p42, %p43
      %p45 = scmp.ne.s32.totalorder %s31, %s32
      %p46 = scmp.eq.s32.totalorder %s24, 1
      %p47 = por %p45, %p46
      %p49 = scmp.ne.s32.totalorder %s32, %s48
      %p50 = scmp.eq.s32.totalorder %s24, 0
      %p51 = por %p49, %p50
      %s53 = sadd.s32 %s52, 1
      %p56 = scmp.eq.s32.totalorder %s18, 1
      %p57 = scmp.ne.s32.totalorder %s52, %s54
      %p58 = scmp.eq.s32.totalorder %s18, 0
      %p59 = por %p57, %p58
      %p60 = scmp.ne.s32.totalorder %s52, %s54
      %p61 = scmp.eq.s32.totalorder %s23, 1
      %p62 = por %p60, %p61
      %p63 = scmp.ne.s32.totalorder %s54, %s55
      %p64 = scmp.eq.s32.totalorder %s23, 0
      %p65 = por %p63, %p64
      %p66 = scmp.ne.s32.totalorder %s54, %s55
      %p67 = scmp.eq.s32.totalorder %s24, 1
      %p68 = por %p66, %p67
      %p70 = scmp.ne.s32.totalorder %s55, %s69
      %p71 = scmp.eq.s32.totalorder %s24, 0
      %p72 = por %p70, %p71
      %s74 = sadd.s32 %s73, 1
      %p77 = scmp.eq.s32.totalorder %s18, 1
      %p78 = scmp.ne.s32.totalorder %s73, %s75
      %p79 = scmp.eq.s32.totalorder %s18, 0
      %p80 = por %p78, %p79
      %p81 = scmp.ne.s32.totalorder %s73, %s75
      %p82 = scmp.eq.s32.totalorder %s23, 1
      %p83 = por %p81, %p82
      %p84 = scmp.ne.s32.totalorder %s75, %s76
      %p85 = scmp.eq.s32.totalorder %s23, 0
      %p86 = por %p84, %p85
      %p87 = scmp.ne.s32.totalorder %s75, %s76
      %p88 = scmp.eq.s32.totalorder %s24, 1
      %p89 = por %p87, %p88
      %p91 = scmp.ne.s32.totalorder %s76, %s90
      %p92 = scmp.eq.s32.totalorder %s24, 0
      %p93 = por %p91, %p92
      %s95 = sadd.s32 %s94, 1
      %p98 = scmp.eq.s32.totalorder %s18, 1
      %p99 = scmp.ne.s32.totalorder %s94, %s96
      %p100 = scmp.eq.s32.totalorder %s18, 0
      %p101 = por %p99, %p100
      %p102 = scmp.ne.s32.totalorder %s94, %s96
      %p103 = scmp.eq.s32.totalorder %s23, 1
      %p104 = por %p102, %p103
      %p105 = scmp.ne.s32.totalorder %s96, %s97
      %p106 = scmp.eq.s32.totalorder %s23, 0
      %p107 = por %p105, %p106
      %p108 = scmp.ne.s32.totalorder %s96, %s97
      %p109 = scmp.eq.s32.totalorder %s24, 1
      %p110 = por %p108, %p109
      %p112 = scmp.ne.s32.totalorder %s97, %s111
      %p113 = scmp.eq.s32.totalorder %s24, 0
      %p114 = por %p112, %p113
      %s116 = sadd.s32 %s115, 1
      %p119 = scmp.eq.s32.totalorder %s18, 1
      %p120 = scmp.ne.s32.totalorder %s115, %s117
      %p121 = scmp.eq.s32.totalorder %s18, 0
      %p122 = por %p120, %p121
      %p123 = scmp.ne.s32.totalorder %s115, %s117
      %p124 = scmp.eq.s32.totalorder %s23, 1
      %p125 = por %p123, %p124
      %p126 = scmp.ne.s32.totalorder %s117, %s118
      %p127 = scmp.eq.s32.totalorder %s23, 0
      %p128 = por %p126, %p127
      %p129 = scmp.ne.s32.totalorder %s117, %s118
      %p130 = scmp.eq.s32.totalorder %s24, 1
      %p131 = por %p129, %p130
      %p133 = scmp.ne.s32.totalorder %s118, %s132
      %p134 = scmp.eq.s32.totalorder %s24, 0
      %p135 = por %p133, %p134
      %s137 = sadd.s32 %s136, 1
      %p140 = scmp.eq.s32.totalorder %s18, 1
      %p141 = scmp.ne.s32.totalorder %s136, %s138
      %p142 = scmp.eq.s32.totalorder %s18, 0
      %p143 = por %p141, %p142
      %p144 = scmp.ne.s32.totalorder %s136, %s138
      %p145 = scmp.eq.s32.totalorder %s23, 1
      %p146 = por %p144, %p145
      %p147 = scmp.ne.s32.totalorder %s138, %s139
      %p148 = scmp.eq.s32.totalorder %s23, 0
      %p149 = por %p147, %p148
      %p150 = scmp.ne.s32.totalorder %s138, %s139
      %p151 = scmp.eq.s32.totalorder %s24, 1
      %p152 = por %p150, %p151
      %p154 = scmp.ne.s32.totalorder %s139, %s153
      %p155 = scmp.eq.s32.totalorder %s24, 0
      %p156 = por %p154, %p155
      %s158 = sadd.s32 %s157, 1
      %p161 = scmp.eq.s32.totalorder %s18, 1
      %p162 = scmp.ne.s32.totalorder %s157, %s159
      %p163 = scmp.eq.s32.totalorder %s18, 0
      %p164 = por %p162, %p163
      %p165 = scmp.ne.s32.totalorder %s157, %s159
      %p166 = scmp.eq.s32.totalorder %s23, 1
      %p167 = por %p165, %p166
      %p168 = scmp.ne.s32.totalorder %s159, %s160
      %p169 = scmp.eq.s32.totalorder %s23, 0
      %p170 = por %p168, %p169
      %p171 = scmp.ne.s32.totalorder %s159, %s160
      %p172 = scmp.eq.s32.totalorder %s24, 1
      %p173 = por %p171, %p172
      %p175 = scmp.ne.s32.totalorder %s160, %s174
      %p176 = scmp.eq.s32.totalorder %s24, 0
      %p177 = por %p175, %p176
      %s178 = ssub.s32 %s18, %s25
      %p179 = scmp.eq.s32.totalorder %s178, 0
      %s181 = sadd.s32 %s180, 1
      %s182 = scalar_select %p179, %s180, %s181
      %p185 = pneg %p179
      %p186 = scmp.eq.s32.totalorder %s18, 1
      %p187 = por %p185, %p186
      %p188 = scmp.ne.s32.totalorder %s180, %s183
      %p189 = scmp.eq.s32.totalorder %s18, 0
      %p190 = por %p188, %p189
      %p191 = scmp.ne.s32.totalorder %s180, %s183
      %p192 = scmp.eq.s32.totalorder %s23, 1
      %p193 = por %p191, %p192
      %p194 = scmp.ne.s32.totalorder %s183, %s184
      %p195 = scmp.eq.s32.totalorder %s23, 0
      %p196 = por %p194, %p195
      %p197 = scmp.ne.s32.totalorder %s183, %s184
      %p198 = scmp.eq.s32.totalorder %s24, 1
      %p199 = por %p197, %p198
      %p201 = scmp.ne.s32.totalorder %s184, %s200
      %p202 = scmp.eq.s32.totalorder %s24, 0
      %p203 = por %p201, %p202
      %p204 = scmp.le.s32.totalorder 1, %s18
      %p205 = scmp.lt.s32.totalorder %s18, 3
      %p206 = pnand %p204, %p205
      %p207 = pneg %p206
      // Predicated region
      $region9: #{mlp_forward.1} parent=5 // pred_check
        _
      $region10: #{mlp_forward.1} parent=5 // pred_check_branch
        %209 = sbr.rel (%p206) target = $region12
      $region11: #{mlp_forward.1} parent=5 // pred_region
        %s210 = ssub.s32 %s18, 1
        // Predicated region
        $region13: #{mlp_forward.1} parent=11 // pred_check
          %p211 = pneg %p65
        $region14: #{mlp_forward.1} parent=11 // pred_check_branch
          %213 = sbr.rel (%p211) target = $region16
        $region15: #{mlp_forward.1} parent=11 // pred_region
          _
        $region16: #{mlp_forward.1} parent=11 // pred_fallthru
          _
        // Predicated region
        $region17: #{mlp_forward.1} parent=11 // pred_check
          %p214 = pneg %p86
        $region18: #{mlp_forward.1} parent=11 // pred_check_branch
          %216 = sbr.rel (%p214) target = $region20
        $region19: #{mlp_forward.1} parent=11 // pred_region
          _
        $region20: #{mlp_forward.1} parent=11 // pred_fallthru
          _
        // Predicated region
        $region21: #{mlp_forward.1} parent=11 // pred_check
          %p217 = pneg %p107
        $region22: #{mlp_forward.1} parent=11 // pred_check_branch
          %219 = sbr.rel (%p217) target = $region24
        $region23: #{mlp_forward.1} parent=11 // pred_region
          _
        $region24: #{mlp_forward.1} parent=11 // pred_fallthru
          _
        // Predicated region
        $region25: #{mlp_forward.1} parent=11 // pred_check
          %p220 = pneg %p128
        $region26: #{mlp_forward.1} parent=11 // pred_check_branch
          %222 = sbr.rel (%p220) target = $region28
        $region27: #{mlp_forward.1} parent=11 // pred_region
          _
        $region28: #{mlp_forward.1} parent=11 // pred_fallthru
          _
        // Predicated region
        $region29: #{mlp_forward.1} parent=11 // pred_check
          %p223 = pneg %p149
        $region30: #{mlp_forward.1} parent=11 // pred_check_branch
          %225 = sbr.rel (%p223) target = $region32
        $region31: #{mlp_forward.1} parent=11 // pred_region
          _
        $region32: #{mlp_forward.1} parent=11 // pred_fallthru
          _
        // Predicated region
        $region33: #{mlp_forward.1} parent=11 // pred_check
          %p226 = pneg %p170
        $region34: #{mlp_forward.1} parent=11 // pred_check_branch
          %228 = sbr.rel (%p226) target = $region36
        $region35: #{mlp_forward.1} parent=11 // pred_region
          _
        $region36: #{mlp_forward.1} parent=11 // pred_fallthru
          _
      $region12: #{mlp_forward.1} parent=5 // pred_fallthru
        _
      %p229 = scmp.lt.s32.totalorder %s18, 2
      // Predicated region
      $region37: #{mlp_forward.1} parent=5 // pred_check
        %p230 = pneg %p229
      $region38: #{mlp_forward.1} parent=5 // pred_check_branch
        %232 = sbr.rel (%p230) target = $region40
      $region39: #{mlp_forward.1} parent=5 // pred_region
        // Predicated region
        $region41: #{mlp_forward.1} parent=39 // pred_check
          %p233 = pneg %p38
        $region42: #{mlp_forward.1} parent=39 // pred_check_branch
          %235 = sbr.rel (%p233) target = $region44
        $region43: #{mlp_forward.1} parent=39 // pred_region
          %s236 = smul.u32 16, %s18
          %p237 = scmp.lt.s32.totalorder %s236, 31
          %s238 = scalar_select %p237, %s236, 31
          %s239 = smul.addr %s238, 8
          %s240 = scalar_lea.vmem %s0, %s239
          %s241 = smul.u32 16, %s18
        $region44: #{mlp_forward.1} parent=39 // pred_fallthru
          _
      $region40: #{mlp_forward.1} parent=5 // pred_fallthru
        _
      %p242 = scmp.le.s32.totalorder 1, %s18
      %p243 = scmp.lt.s32.totalorder %s18, 3
      %p244 = pnand %p242, %p243
      %p245 = pneg %p244
      // Predicated region
      $region45: #{mlp_forward.1} parent=5 // pred_check
        _
      $region46: #{mlp_forward.1} parent=5 // pred_check_branch
        %247 = sbr.rel (%p244) target = $region48
      $region47: #{mlp_forward.1} parent=5 // pred_region
        %s248 = ssub.s32 %s18, 1
        %s249 = smul.u32 16, %s23
        %p250 = scmp.lt.s32.totalorder %s249, 31
        %s251 = scalar_select %p250, %s249, 31
        %s252 = smul.addr %s251, 8
        %s253 = scalar_lea.vmem %s0, %s252
        %p254 = pneg %p44
        %p255 = pneg %p41
        %p256 = pneg %p65
        %p257 = pneg %p62
        %p258 = pneg %p86
        %p259 = pneg %p83
        %p260 = pneg %p107
        %p261 = pneg %p104
        %p262 = pneg %p128
        %p263 = pneg %p125
        %p264 = pneg %p149
        %p265 = pneg %p146
        %p266 = pneg %p170
        %p267 = pneg %p167
        %p268 = pneg %p196
        %p269 = pneg %p193
        %s270 = sand.u32 %s183, 1
        %s271 = scalar_lea.sflag [#allocation4], %s270
        %s272 = sand.u32 %s183, 1
        %s273 = scalar_lea.vmem [#allocation3], %s272
        %s274 = smul.u32 16, %s23
        %p275 = scmp.lt.s32.totalorder %s274, 31
        %s276 = scalar_select %p275, %s274, 31
        %s277 = smul.addr %s276, 8
        %s278 = scalar_lea.vmem %s0, %s277
        %s279 = smul.u32 16, %s23
        %v281 = vld [vmem:[%s278] sm:$0xff]
        %v282 = vld [vmem:[%s278 + $0x8] sm:$0xff]
        %v283 = vld [vmem:[%s278 + $0x10] sm:$0xff]
        %v284 = vld [vmem:[%s278 + $0x18] sm:$0xff]
        %v285 = vld [vmem:[%s278 + $0x20] sm:$0xff]
        %v286 = vld [vmem:[%s278 + $0x28] sm:$0xff]
        %v287 = vld [vmem:[%s278 + $0x30] sm:$0xff]
        %v288 = vld [vmem:[%s278 + $0x38] sm:$0xff]
        %v289 = vld [vmem:[%s278 + $0x40] sm:$0xff]
        %v290 = vld [vmem:[%s278 + $0x48] sm:$0xff]
        %v291 = vld [vmem:[%s278 + $0x50] sm:$0xff]
        %v292 = vld [vmem:[%s278 + $0x58] sm:$0xff]
        %v293 = vld [vmem:[%s278 + $0x60] sm:$0xff]
        %v294 = vld [vmem:[%s278 + $0x68] sm:$0xff]
        %v295 = vld [vmem:[%s278 + $0x70] sm:$0xff]
        %v296 = vld [vmem:[%s278 + $0x78] sm:$0xff]
        %v297 = vpack.c.bf16 %v282, %v281
        %v298 = vpack.c.bf16 %v284, %v283
        %v299 = vpack.c.bf16 %v286, %v285
        %v300 = vpack.c.bf16 %v288, %v287
        %v301 = vpack.c.bf16 %v290, %v289
        %v302 = vpack.c.bf16 %v292, %v291
        %v303 = vpack.c.bf16 %v294, %v293
        %v304 = vpack.c.bf16 %v296, %v295
        %v305 = vld [vmem:[%s1] sm:$0xf]
        %v306 = vld [vmem:[%s1 + $0x4] sm:$0xf]
        %v307 = vld [vmem:[%s1 + $0x8] sm:$0xf]
        %v308 = vld [vmem:[%s1 + $0xc] sm:$0xf]
        %v309 = vld [vmem:[%s1 + $0x10] sm:$0xf]
        %v310 = vld [vmem:[%s1 + $0x14] sm:$0xf]
        %v311 = vld [vmem:[%s1 + $0x18] sm:$0xf]
        %v312 = vld [vmem:[%s1 + $0x1c] sm:$0xf]
        %v313 = vld [vmem:[%s1 + $0x20] sm:$0x1]
        %v314 = vld [vmem:[%s2] sm:$0x1]
        %v316 = vlaneseq
        %v317 = vshrl.u32 %v316, 7
        %v318 = vsub.s32 0, %v317
        %v319 = vrot.slane %v314, %v318
        %v330 = vunpack.c.l.b16 %v305
        %v331 = vunpack.c.l.b16 %v306
        %v332 = vunpack.c.l.b16 %v307
        %v333 = vunpack.c.l.b16 %v308
        %v334 = vunpack.c.l.b16 %v309
        %v335 = vunpack.c.l.b16 %v310
        %v336 = vunpack.c.l.b16 %v311
        %v337 = vunpack.c.l.b16 %v312
        %v338 = vunpack.c.l.b16 %v313
        %v339 = vpack.c.b16 %v331, %v330
        %v340 = vpack.c.b16 %v333, %v332
        %v341 = vpack.c.b16 %v335, %v334
        %v342 = vpack.c.b16 %v337, %v336
        %v343 = vpack.c.b16 %v338, %v338
        %vm348 = vcmask 539648
        %v350 = vsel %vm348, %v297, 0
        %v353 = vsel %vm348, %v298, 0
        %v356 = vsel %vm348, %v299, 0
        %v359 = vsel %vm348, %v300, 0
        %v362 = vsel %vm348, %v301, 0
        %v365 = vsel %vm348, %v302, 0
        %v368 = vsel %vm348, %v303, 0
        %v371 = vsel %vm348, %v304, 0
        %vm373 = vcmask 1040384
        %v375 = vsel %vm373, %v343, 0
        %377 = vmatprep.subr.bf16.mxu0 0
        %378 = vmatpush1.bf16.msra.mxu0 %v339
        %379 = vmatprep.subr.bf16.mxu0 0
        %380 = vmatpush1.bf16.msra.mxu0 %v340
        %381 = vmatprep.subr.bf16.mxu0 0
        %382 = vmatpush1.bf16.msra.mxu0 %v341
        %383 = vmatprep.subr.bf16.mxu0 0
        %384 = vmatpush1.bf16.msra.mxu0 %v342
        %385 = vmatprep.subr.bf16.mxu0 0
        %386 = vmatpush1.bf16.msra.mxu0 %v375
        %387 = vmatprep.subr.bf16.mxu0 0
        %388 = vmatpush1.bf16.msra.mxu0 0
        %389 = vmatprep.subr.bf16.mxu0 0
        %390 = vmatpush1.bf16.msra.mxu0 0
        %391 = vmatprep.subr.bf16.mxu0 0
        %392 = vmatpush1.bf16.msra.mxu0 0
        %393 = vmatprep.subr.bf16.mxu0 0
        %394 = vmatpush1.bf16.msra.mxu0 0
        %395 = vmatprep.subr.bf16.mxu0 0
        %396 = vmatpush1.bf16.msra.mxu0 0
        %397 = vmatprep.subr.bf16.mxu0 0
        %398 = vmatpush1.bf16.msra.mxu0 0
        %399 = vmatprep.subr.bf16.mxu0 0
        %400 = vmatpush1.bf16.msra.mxu0 0
        %401 = vmatprep.subr.bf16.mxu0 0
        %402 = vmatpush1.bf16.msra.mxu0 0
        %403 = vmatprep.subr.bf16.mxu0 0
        %404 = vmatpush1.bf16.msra.mxu0 0
        %405 = vmatprep.subr.bf16.mxu0 0
        %406 = vmatpush1.bf16.msra.mxu0 0
        %407 = vmatprep.subr.bf16.mxu0 0
        %408 = vmatpush1.bf16.msra.mxu0 0
        %409 = vmatprep.mubr.bf16.mxu0 0
        %410 = vmatmul.mubr.bf16.gmra.mrb[0].mxu0 %v350
        %v411 = vpop.f32.mrb[0].mxu0
        %v412 = vadd.f32 %v319, %v411
        %v413 = vpop.f32.mrb[0].mxu0
        %v414 = vpop.f32.mrb[0].mxu0
        %v415 = vadd.f32 %v319, %v414
        %v416 = vpop.f32.mrb[0].mxu0
        %417 = vmatprep.mubr.bf16.mxu0 0
        %418 = vmatmul.mubr.bf16.gmra.mrb[0].mxu0 %v353
        %v419 = vpop.f32.mrb[0].mxu0
        %v420 = vadd.f32 %v319, %v419
        %v421 = vpop.f32.mrb[0].mxu0
        %v422 = vpop.f32.mrb[0].mxu0
        %v423 = vadd.f32 %v319, %v422
        %v424 = vpop.f32.mrb[0].mxu0
        %425 = vmatprep.mubr.bf16.mxu0 0
        %426 = vmatmul.mubr.bf16.gmra.mrb[0].mxu0 %v356
        %v427 = vpop.f32.mrb[0].mxu0
        %v428 = vadd.f32 %v319, %v427
        %v429 = vpop.f32.mrb[0].mxu0
        %v430 = vpop.f32.mrb[0].mxu0
        %v431 = vadd.f32 %v319, %v430
        %v432 = vpop.f32.mrb[0].mxu0
        %433 = vmatprep.mubr.bf16.mxu0 0
        %434 = vmatmul.mubr.bf16.gmra.mrb[0].mxu0 %v359
        %v435 = vpop.f32.mrb[0].mxu0
        %v436 = vadd.f32 %v319, %v435
        %v437 = vpop.f32.mrb[0].mxu0
        %v438 = vpop.f32.mrb[0].mxu0
        %v439 = vadd.f32 %v319, %v438
        %v440 = vpop.f32.mrb[0].mxu0
        %441 = vmatprep.mubr.bf16.mxu0 0
        %442 = vmatmul.mubr.bf16.gmra.mrb[0].mxu0 %v362
        %v443 = vpop.f32.mrb[0].mxu0
        %v444 = vadd.f32 %v319, %v443
        %v445 = vpop.f32.mrb[0].mxu0
        %v446 = vpop.f32.mrb[0].mxu0
        %v447 = vadd.f32 %v319, %v446
        %v448 = vpop.f32.mrb[0].mxu0
        %449 = vmatprep.mubr.bf16.mxu0 0
        %450 = vmatmul.mubr.bf16.gmra.mrb[0].mxu0 %v365
        %v451 = vpop.f32.mrb[0].mxu0
        %v452 = vadd.f32 %v319, %v451
        %v453 = vpop.f32.mrb[0].mxu0
        %v454 = vpop.f32.mrb[0].mxu0
        %v455 = vadd.f32 %v319, %v454
        %v456 = vpop.f32.mrb[0].mxu0
        %457 = vmatprep.mubr.bf16.mxu0 0
        %458 = vmatmul.mubr.bf16.gmra.mrb[0].mxu0 %v368
        %v459 = vpop.f32.mrb[0].mxu0
        %v460 = vadd.f32 %v319, %v459
        %v461 = vpop.f32.mrb[0].mxu0
        %v462 = vpop.f32.mrb[0].mxu0
        %v463 = vadd.f32 %v319, %v462
        %v464 = vpop.f32.mrb[0].mxu0
        %465 = vmatprep.mubr.bf16.mxu0 0
        %466 = vmatmul.mubr.bf16.gmra.mrb[0].mxu0 %v371
        %v467 = vpop.f32.mrb[0].mxu0
        %v468 = vadd.f32 %v319, %v467
        %v469 = vpop.f32.mrb[0].mxu0
        %v470 = vpop.f32.mrb[0].mxu0
        %v471 = vadd.f32 %v319, %v470
        %v472 = vpop.f32.mrb[0].mxu0
        %473 = vdwg.mxu0
        %v474 = vmax.f32 %v412, 0.0
        %v475 = vmax.f32 %v415, 0.0
        %v476 = vmax.f32 %v420, 0.0
        %v477 = vmax.f32 %v423, 0.0
        %v478 = vmax.f32 %v428, 0.0
        %v479 = vmax.f32 %v431, 0.0
        %v480 = vmax.f32 %v436, 0.0
        %v481 = vmax.f32 %v439, 0.0
        %v482 = vmax.f32 %v444, 0.0
        %v483 = vmax.f32 %v447, 0.0
        %v484 = vmax.f32 %v452, 0.0
        %v485 = vmax.f32 %v455, 0.0
        %v486 = vmax.f32 %v460, 0.0
        %v487 = vmax.f32 %v463, 0.0
        %v488 = vmax.f32 %v468, 0.0
        %v489 = vmax.f32 %v471, 0.0
        %v490 = vpack.c.bf16 %v475, %v474
        %v491 = vpack.c.bf16 %v477, %v476
        %v492 = vpack.c.bf16 %v479, %v478
        %v493 = vpack.c.bf16 %v481, %v480
        %v494 = vpack.c.bf16 %v483, %v482
        %v495 = vpack.c.bf16 %v485, %v484
        %v496 = vpack.c.bf16 %v487, %v486
        %v497 = vpack.c.bf16 %v489, %v488
        %v498 = vld [vmem:[%s3] sm:$0xf]
        %v499 = vld [vmem:[%s3 + $0x4] sm:$0xf]
        %v500 = vld [vmem:[%s3 + $0x8] sm:$0xf]
        %v501 = vld [vmem:[%s3 + $0xc] sm:$0xf]
        %v502 = vld [vmem:[%s3 + $0x10] sm:$0xf]
        %v503 = vld [vmem:[%s3 + $0x14] sm:$0xf]
        %v504 = vld [vmem:[%s3 + $0x18] sm:$0xf]
        %v505 = vld [vmem:[%s3 + $0x1c] sm:$0xf]
        %v506 = vld [vmem:[%s3 + $0x20] sm:$0xf]
        %v507 = vld [vmem:[%s3 + $0x24] sm:$0xf]
        %v508 = vld [vmem:[%s3 + $0x28] sm:$0xf]
        %v509 = vld [vmem:[%s3 + $0x2c] sm:$0xf]
        %v510 = vld [vmem:[%s3 + $0x30] sm:$0xf]
        %v511 = vld [vmem:[%s3 + $0x34] sm:$0xf]
        %v512 = vld [vmem:[%s3 + $0x38] sm:$0xf]
        %v513 = vld [vmem:[%s3 + $0x3c] sm:$0xf]
        %v514 = vld [vmem:[%s4] sm:$0x1]
        %v516 = vlaneseq
        %v517 = vshrl.u32 %v516, 7
        %v518 = vsub.s32 0, %v517
        %v519 = vrot.slane %v514, %v518
        %v537 = vunpack.c.l.b16 %v498
        %v538 = vunpack.c.l.b16 %v499
        %v539 = vunpack.c.l.b16 %v500
        %v540 = vunpack.c.l.b16 %v501
        %v541 = vunpack.c.l.b16 %v502
        %v542 = vunpack.c.l.b16 %v503
        %v543 = vunpack.c.l.b16 %v504
        %v544 = vunpack.c.l.b16 %v505
        %v545 = vunpack.c.l.b16 %v506
        %v546 = vunpack.c.l.b16 %v507
        %v547 = vunpack.c.l.b16 %v508
        %v548 = vunpack.c.l.b16 %v509
        %v549 = vunpack.c.l.b16 %v510
        %v550 = vunpack.c.l.b16 %v511
        %v551 = vunpack.c.l.b16 %v512
        %v552 = vunpack.c.l.b16 %v513
        %v553 = vpack.c.b16 %v538, %v537
        %v554 = vpack.c.b16 %v540, %v539
        %v555 = vpack.c.b16 %v542, %v541
        %v556 = vpack.c.b16 %v544, %v543
        %v557 = vpack.c.b16 %v546, %v545
        %v558 = vpack.c.b16 %v548, %v547
        %v559 = vpack.c.b16 %v550, %v549
        %v560 = vpack.c.b16 %v552, %v551
        %569 = vmatprep.subr.bf16.mxu0 0
        %570 = vmatpush1.bf16.msra.mxu0 %v553
        %571 = vmatprep.subr.bf16.mxu0 0
        %572 = vmatpush1.bf16.msra.mxu0 %v554
        %573 = vmatprep.subr.bf16.mxu0 0
        %574 = vmatpush1.bf16.msra.mxu0 %v555
        %575 = vmatprep.subr.bf16.mxu0 0
        %576 = vmatpush1.bf16.msra.mxu0 %v556
        %577 = vmatprep.subr.bf16.mxu0 0
        %578 = vmatpush1.bf16.msra.mxu0 %v557
        %579 = vmatprep.subr.bf16.mxu0 0
        %580 = vmatpush1.bf16.msra.mxu0 %v558
        %581 = vmatprep.subr.bf16.mxu0 0
        %582 = vmatpush1.bf16.msra.mxu0 %v559
        %583 = vmatprep.subr.bf16.mxu0 0
        %584 = vmatpush1.bf16.msra.mxu0 %v560
        %585 = vmatprep.subr.bf16.mxu0 0
        %586 = vmatpush1.bf16.msra.mxu0 0
        %587 = vmatprep.subr.bf16.mxu0 0
        %588 = vmatpush1.bf16.msra.mxu0 0
        %589 = vmatprep.subr.bf16.mxu0 0
        %590 = vmatpush1.bf16.msra.mxu0 0
        %591 = vmatprep.subr.bf16.mxu0 0
        %592 = vmatpush1.bf16.msra.mxu0 0
        %593 = vmatprep.subr.bf16.mxu0 0
        %594 = vmatpush1.bf16.msra.mxu0 0
        %595 = vmatprep.subr.bf16.mxu0 0
        %596 = vmatpush1.bf16.msra.mxu0 0
        %597 = vmatprep.subr.bf16.mxu0 0
        %598 = vmatpush1.bf16.msra.mxu0 0
        %599 = vmatprep.subr.bf16.mxu0 0
        %600 = vmatpush1.bf16.msra.mxu0 0
        %601 = vmatprep.mubr.bf16.mxu0 0
        %602 = vmatmul.mubr.bf16.gmra.mrb[0].mxu0 %v490
        %v603 = vpop.f32.mrb[0].mxu0
        %v604 = vadd.f32 %v519, %v603
        %v605 = vpop.f32.mrb[0].mxu0
        %v606 = vpop.f32.mrb[0].mxu0
        %v607 = vadd.f32 %v519, %v606
        %v608 = vpop.f32.mrb[0].mxu0
        %609 = vmatprep.mubr.bf16.mxu0 0
        %610 = vmatmul.mubr.bf16.gmra.mrb[0].mxu0 %v491
        %v611 = vpop.f32.mrb[0].mxu0
        %v612 = vadd.f32 %v519, %v611
        %v613 = vpop.f32.mrb[0].mxu0
        %v614 = vpop.f32.mrb[0].mxu0
        %v615 = vadd.f32 %v519, %v614
        %v616 = vpop.f32.mrb[0].mxu0
        %617 = vmatprep.mubr.bf16.mxu0 0
        %618 = vmatmul.mubr.bf16.gmra.mrb[0].mxu0 %v492
        %v619 = vpop.f32.mrb[0].mxu0
        %v620 = vadd.f32 %v519, %v619
        %v621 = vpop.f32.mrb[0].mxu0
        %v622 = vpop.f32.mrb[0].mxu0
        %v623 = vadd.f32 %v519, %v622
        %v624 = vpop.f32.mrb[0].mxu0
        %625 = vmatprep.mubr.bf16.mxu0 0
        %626 = vmatmul.mubr.bf16.gmra.mrb[0].mxu0 %v493
        %v627 = vpop.f32.mrb[0].mxu0
        %v628 = vadd.f32 %v519, %v627
        %v629 = vpop.f32.mrb[0].mxu0
        %v630 = vpop.f32.mrb[0].mxu0
        %v631 = vadd.f32 %v519, %v630
        %v632 = vpop.f32.mrb[0].mxu0
        %633 = vmatprep.mubr.bf16.mxu0 0
        %634 = vmatmul.mubr.bf16.gmra.mrb[0].mxu0 %v494
        %v635 = vpop.f32.mrb[0].mxu0
        %v636 = vadd.f32 %v519, %v635
        %v637 = vpop.f32.mrb[0].mxu0
        %v638 = vpop.f32.mrb[0].mxu0
        %v639 = vadd.f32 %v519, %v638
        %v640 = vpop.f32.mrb[0].mxu0
        %641 = vmatprep.mubr.bf16.mxu0 0
        %642 = vmatmul.mubr.bf16.gmra.mrb[0].mxu0 %v495
        %v643 = vpop.f32.mrb[0].mxu0
        %v644 = vadd.f32 %v519, %v643
        %v645 = vpop.f32.mrb[0].mxu0
        %v646 = vpop.f32.mrb[0].mxu0
        %v647 = vadd.f32 %v519, %v646
        %v648 = vpop.f32.mrb[0].mxu0
        %649 = vmatprep.mubr.bf16.mxu0 0
        %650 = vmatmul.mubr.bf16.gmra.mrb[0].mxu0 %v496
        %v651 = vpop.f32.mrb[0].mxu0
        %v652 = vadd.f32 %v519, %v651
        %v653 = vpop.f32.mrb[0].mxu0
        %v654 = vpop.f32.mrb[0].mxu0
        %v655 = vadd.f32 %v519, %v654
        %v656 = vpop.f32.mrb[0].mxu0
        %657 = vmatprep.mubr.bf16.mxu0 0
        %658 = vmatmul.mubr.bf16.gmra.mrb[0].mxu0 %v497
        %v659 = vpop.f32.mrb[0].mxu0
        %v660 = vadd.f32 %v519, %v659
        %v661 = vpop.f32.mrb[0].mxu0
        %v662 = vpop.f32.mrb[0].mxu0
        %v663 = vadd.f32 %v519, %v662
        %v664 = vpop.f32.mrb[0].mxu0
        %665 = vdwg.mxu0
        %v666 = vmax.f32 %v604, 0.0
        %v667 = vmax.f32 %v607, 0.0
        %v668 = vmax.f32 %v612, 0.0
        %v669 = vmax.f32 %v615, 0.0
        %v670 = vmax.f32 %v620, 0.0
        %v671 = vmax.f32 %v623, 0.0
        %v672 = vmax.f32 %v628, 0.0
        %v673 = vmax.f32 %v631, 0.0
        %v674 = vmax.f32 %v636, 0.0
        %v675 = vmax.f32 %v639, 0.0
        %v676 = vmax.f32 %v644, 0.0
        %v677 = vmax.f32 %v647, 0.0
        %v678 = vmax.f32 %v652, 0.0
        %v679 = vmax.f32 %v655, 0.0
        %v680 = vmax.f32 %v660, 0.0
        %v681 = vmax.f32 %v663, 0.0
        %v682 = vpack.c.bf16 %v667, %v666
        %v683 = vpack.c.bf16 %v669, %v668
        %v684 = vpack.c.bf16 %v671, %v670
        %v685 = vpack.c.bf16 %v673, %v672
        %v686 = vpack.c.bf16 %v675, %v674
        %v687 = vpack.c.bf16 %v677, %v676
        %v688 = vpack.c.bf16 %v679, %v678
        %v689 = vpack.c.bf16 %v681, %v680
        %s690 = scalar_lea.vmem %s3, 64
        %v691 = vld [vmem:[%s690] sm:$0xf]
        %v692 = vld [vmem:[%s690 + $0x4] sm:$0xf]
        %v693 = vld [vmem:[%s690 + $0x8] sm:$0xf]
        %v694 = vld [vmem:[%s690 + $0xc] sm:$0xf]
        %v695 = vld [vmem:[%s690 + $0x10] sm:$0xf]
        %v696 = vld [vmem:[%s690 + $0x14] sm:$0xf]
        %v697 = vld [vmem:[%s690 + $0x18] sm:$0xf]
        %v698 = vld [vmem:[%s690 + $0x1c] sm:$0xf]
        %v699 = vld [vmem:[%s690 + $0x20] sm:$0xf]
        %v700 = vld [vmem:[%s690 + $0x24] sm:$0xf]
        %v701 = vld [vmem:[%s690 + $0x28] sm:$0xf]
        %v702 = vld [vmem:[%s690 + $0x2c] sm:$0xf]
        %v703 = vld [vmem:[%s690 + $0x30] sm:$0xf]
        %v704 = vld [vmem:[%s690 + $0x34] sm:$0xf]
        %v705 = vld [vmem:[%s690 + $0x38] sm:$0xf]
        %v706 = vld [vmem:[%s690 + $0x3c] sm:$0xf]
        %s707 = scalar_lea.vmem %s4, 1
        %v708 = vld [vmem:[%s707] sm:$0x1]
        %v710 = vlaneseq
        %v711 = vshrl.u32 %v710, 7
        %v712 = vsub.s32 0, %v711
        %v713 = vrot.slane %v708, %v712
        %v731 = vunpack.c.l.b16 %v691
        %v732 = vunpack.c.l.b16 %v692
        %v733 = vunpack.c.l.b16 %v693
        %v734 = vunpack.c.l.b16 %v694
        %v735 = vunpack.c.l.b16 %v695
        %v736 = vunpack.c.l.b16 %v696
        %v737 = vunpack.c.l.b16 %v697
        %v738 = vunpack.c.l.b16 %v698
        %v739 = vunpack.c.l.b16 %v699
        %v740 = vunpack.c.l.b16 %v700
        %v741 = vunpack.c.l.b16 %v701
        %v742 = vunpack.c.l.b16 %v702
        %v743 = vunpack.c.l.b16 %v703
        %v744 = vunpack.c.l.b16 %v704
        %v745 = vunpack.c.l.b16 %v705
        %v746 = vunpack.c.l.b16 %v706
        %v747 = vpack.c.b16 %v732, %v731
        %v748 = vpack.c.b16 %v734, %v733
        %v749 = vpack.c.b16 %v736, %v735
        %v750 = vpack.c.b16 %v738, %v737
        %v751 = vpack.c.b16 %v740, %v739
        %v752 = vpack.c.b16 %v742, %v741
        %v753 = vpack.c.b16 %v744, %v743
        %v754 = vpack.c.b16 %v746, %v745
        %763 = vmatprep.subr.bf16.mxu0 0
        %764 = vmatpush1.bf16.msra.mxu0 %v747
        %765 = vmatprep.subr.bf16.mxu0 0
        %766 = vmatpush1.bf16.msra.mxu0 %v748
        %767 = vmatprep.subr.bf16.mxu0 0
        %768 = vmatpush1.bf16.msra.mxu0 %v749
        %769 = vmatprep.subr.bf16.mxu0 0
        %770 = vmatpush1.bf16.msra.mxu0 %v750
        %771 = vmatprep.subr.bf16.mxu0 0
        %772 = vmatpush1.bf16.msra.mxu0 %v751
        %773 = vmatprep.subr.bf16.mxu0 0
        %774 = vmatpush1.bf16.msra.mxu0 %v752
        %775 = vmatprep.subr.bf16.mxu0 0
        %776 = vmatpush1.bf16.msra.mxu0 %v753
        %777 = vmatprep.subr.bf16.mxu0 0
        %778 = vmatpush1.bf16.msra.mxu0 %v754
        %779 = vmatprep.subr.bf16.mxu0 0
        %780 = vmatpush1.bf16.msra.mxu0 0
        %781 = vmatprep.subr.bf16.mxu0 0
        %782 = vmatpush1.bf16.msra.mxu0 0
        %783 = vmatprep.subr.bf16.mxu0 0
        %784 = vmatpush1.bf16.msra.mxu0 0
        %785 = vmatprep.subr.bf16.mxu0 0
        %786 = vmatpush1.bf16.msra.mxu0 0
        %787 = vmatprep.subr.bf16.mxu0 0
        %788 = vmatpush1.bf16.msra.mxu0 0
        %789 = vmatprep.subr.bf16.mxu0 0
        %790 = vmatpush1.bf16.msra.mxu0 0
        %791 = vmatprep.subr.bf16.mxu0 0
        %792 = vmatpush1.bf16.msra.mxu0 0
        %793 = vmatprep.subr.bf16.mxu0 0
        %794 = vmatpush1.bf16.msra.mxu0 0
        %795 = vmatprep.mubr.bf16.mxu0 0
        %796 = vmatmul.mubr.bf16.gmra.mrb[0].mxu0 %v682
        %v797 = vpop.f32.mrb[0].mxu0
        %v798 = vadd.f32 %v713, %v797
        %v799 = vpop.f32.mrb[0].mxu0
        %v800 = vpop.f32.mrb[0].mxu0
        %v801 = vadd.f32 %v713, %v800
        %v802 = vpop.f32.mrb[0].mxu0
        %803 = vmatprep.mubr.bf16.mxu0 0
        %804 = vmatmul.mubr.bf16.gmra.mrb[0].mxu0 %v683
        %v805 = vpop.f32.mrb[0].mxu0
        %v806 = vadd.f32 %v713, %v805
        %v807 = vpop.f32.mrb[0].mxu0
        %v808 = vpop.f32.mrb[0].mxu0
        %v809 = vadd.f32 %v713, %v808
        %v810 = vpop.f32.mrb[0].mxu0
        %811 = vmatprep.mubr.bf16.mxu0 0
        %812 = vmatmul.mubr.bf16.gmra.mrb[0].mxu0 %v684
        %v813 = vpop.f32.mrb[0].mxu0
        %v814 = vadd.f32 %v713, %v813
        %v815 = vpop.f32.mrb[0].mxu0
        %v816 = vpop.f32.mrb[0].mxu0
        %v817 = vadd.f32 %v713, %v816
        %v818 = vpop.f32.mrb[0].mxu0
        %819 = vmatprep.mubr.bf16.mxu0 0
        %820 = vmatmul.mubr.bf16.gmra.mrb[0].mxu0 %v685
        %v821 = vpop.f32.mrb[0].mxu0
        %v822 = vadd.f32 %v713, %v821
        %v823 = vpop.f32.mrb[0].mxu0
        %v824 = vpop.f32.mrb[0].mxu0
        %v825 = vadd.f32 %v713, %v824
        %v826 = vpop.f32.mrb[0].mxu0
        %827 = vmatprep.mubr.bf16.mxu0 0
        %828 = vmatmul.mubr.bf16.gmra.mrb[0].mxu0 %v686
        %v829 = vpop.f32.mrb[0].mxu0
        %v830 = vadd.f32 %v713, %v829
        %v831 = vpop.f32.mrb[0].mxu0
        %v832 = vpop.f32.mrb[0].mxu0
        %v833 = vadd.f32 %v713, %v832
        %v834 = vpop.f32.mrb[0].mxu0
        %835 = vmatprep.mubr.bf16.mxu0 0
        %836 = vmatmul.mubr.bf16.gmra.mrb[0].mxu0 %v687
        %v837 = vpop.f32.mrb[0].mxu0
        %v838 = vadd.f32 %v713, %v837
        %v839 = vpop.f32.mrb[0].mxu0
        %v840 = vpop.f32.mrb[0].mxu0
        %v841 = vadd.f32 %v713, %v840
        %v842 = vpop.f32.mrb[0].mxu0
        %843 = vmatprep.mubr.bf16.mxu0 0
        %844 = vmatmul.mubr.bf16.gmra.mrb[0].mxu0 %v688
        %v845 = vpop.f32.mrb[0].mxu0
        %v846 = vadd.f32 %v713, %v845
        %v847 = vpop.f32.mrb[0].mxu0
        %v848 = vpop.f32.mrb[0].mxu0
        %v849 = vadd.f32 %v713, %v848
        %v850 = vpop.f32.mrb[0].mxu0
        %851 = vmatprep.mubr.bf16.mxu0 0
        %852 = vmatmul.mubr.bf16.gmra.mrb[0].mxu0 %v689
        %v853 = vpop.f32.mrb[0].mxu0
        %v854 = vadd.f32 %v713, %v853
        %v855 = vpop.f32.mrb[0].mxu0
        %v856 = vpop.f32.mrb[0].mxu0
        %v857 = vadd.f32 %v713, %v856
        %v858 = vpop.f32.mrb[0].mxu0
        %859 = vdwg.mxu0
        %v860 = vmax.f32 %v798, 0.0
        %v861 = vmax.f32 %v801, 0.0
        %v862 = vmax.f32 %v806, 0.0
        %v863 = vmax.f32 %v809, 0.0
        %v864 = vmax.f32 %v814, 0.0
        %v865 = vmax.f32 %v817, 0.0
        %v866 = vmax.f32 %v822, 0.0
        %v867 = vmax.f32 %v825, 0.0
        %v868 = vmax.f32 %v830, 0.0
        %v869 = vmax.f32 %v833, 0.0
        %v870 = vmax.f32 %v838, 0.0
        %v871 = vmax.f32 %v841, 0.0
        %v872 = vmax.f32 %v846, 0.0
        %v873 = vmax.f32 %v849, 0.0
        %v874 = vmax.f32 %v854, 0.0
        %v875 = vmax.f32 %v857, 0.0
        %v876 = vpack.c.bf16 %v861, %v860
        %v877 = vpack.c.bf16 %v863, %v862
        %v878 = vpack.c.bf16 %v865, %v864
        %v879 = vpack.c.bf16 %v867, %v866
        %v880 = vpack.c.bf16 %v869, %v868
        %v881 = vpack.c.bf16 %v871, %v870
        %v882 = vpack.c.bf16 %v873, %v872
        %v883 = vpack.c.bf16 %v875, %v874
        %v884 = vld [vmem:[%s5] sm:$0x1]
        %v885 = vld [vmem:[#allocation2] sm:$0x1]
        %887 = vset.pattern.permute.xlu0 0
        %888 = vperm.xlu0 %887, %v885
        %v889 = vpop.permute.xlu0 %888
        %v891 = vlaneseq
        %v892 = vshrl.u32 %v891, 7
        %v893 = vsub.s32 0, %v892
        %v894 = vrot.slane %v889, %v893
        %895 = vmatprep.subr.bf16.mxu0 0
        %896 = vmatpush1.bf16.xpose.msra.mxu0 %v876
        %897 = vmatprep.subr.bf16.mxu0 0
        %898 = vmatpush1.bf16.xpose.msra.mxu0 %v877
        %899 = vmatprep.subr.bf16.mxu0 0
        %900 = vmatpush1.bf16.xpose.msra.mxu0 %v878
        %901 = vmatprep.subr.bf16.mxu0 0
        %902 = vmatpush1.bf16.xpose.msra.mxu0 %v879
        %903 = vmatprep.subr.bf16.mxu0 0
        %904 = vmatpush1.bf16.xpose.msra.mxu0 %v880
        %905 = vmatprep.subr.bf16.mxu0 0
        %906 = vmatpush1.bf16.xpose.msra.mxu0 %v881
        %907 = vmatprep.subr.bf16.mxu0 0
        %908 = vmatpush1.bf16.xpose.msra.mxu0 %v882
        %909 = vmatprep.subr.bf16.mxu0 0
        %910 = vmatpush1.bf16.xpose.msra.mxu0 %v883
        %911 = vmatprep.subr.bf16.mxu0 0
        %912 = vmatpush1.bf16.xpose.msra.mxu0 0
        %913 = vmatprep.subr.bf16.mxu0 0
        %914 = vmatpush1.bf16.xpose.msra.mxu0 0
        %915 = vmatprep.subr.bf16.mxu0 0
        %916 = vmatpush1.bf16.xpose.msra.mxu0 0
        %917 = vmatprep.subr.bf16.mxu0 0
        %918 = vmatpush1.bf16.xpose.msra.mxu0 0
        %919 = vmatprep.subr.bf16.mxu0 0
        %920 = vmatpush1.bf16.xpose.msra.mxu0 0
        %921 = vmatprep.subr.bf16.mxu0 0
        %922 = vmatpush1.bf16.xpose.msra.mxu0 0
        %923 = vmatprep.subr.bf16.mxu0 0
        %924 = vmatpush1.bf16.xpose.msra.mxu0 0
        %925 = vmatprep.subr.bf16.mxu0 0
        %926 = vmatpush1.bf16.xpose.msra.mxu0 0
        %927 = vmatprep.mubr.bf16.mxu0 0
        %928 = vmatmul.mubr.bf16.gmra.mrb[0].mxu0 %v884
        %v929 = vpop.f32.mrb[0].mxu0
        %v930 = vadd.f32 %v894, %v929
        %v931 = vpop.f32.mrb[0].mxu0
        %v932 = vpop.f32.mrb[0].mxu0
        %v933 = vpop.f32.mrb[0].mxu0
        %934 = vdwg.mxu0
        %935 = vst [vmem:[%s273] sm:$0x1] %v930
        %s936 = sand.u32 %s183, 1
        %s937 = scalar_lea.sflag [#allocation4], %s936
        %s938 = sand.u32 %s183, 1
        %s939 = scalar_lea.vmem [#allocation3], %s938
        // Predicated region
        $region49: #{mlp_forward.1} parent=47 // pred_check
          %p940 = pneg %p193
        $region50: #{mlp_forward.1} parent=47 // pred_check_branch
          %942 = sbr.rel (%p940) target = $region52
        $region51: #{mlp_forward.1} parent=47 // pred_region
          %s944 = ssub.s32 16, 16
          %945 = vsyncadd %s937, %s944
          %s946 = smul.addr %s23, 16
          %s947 = scalar_lea.hbm %s7, %s946
          %s949 = sshll.u32 %s939, 4
          %s950 = int_to_ptr.vmem [resolvable:$true] %s949
          %952 = dma.vmem_to_hbm [thread:$0]  %s950, 16, %s947, %s937
        $region52: #{mlp_forward.1} parent=47 // pred_fallthru
          _
      $region48: #{mlp_forward.1} parent=5 // pred_fallthru
        _
      %p953 = scmp.le.s32.totalorder 2, %s18
      // Predicated region
      $region53: #{mlp_forward.1} parent=5 // pred_check
        %p954 = pneg %p953
      $region54: #{mlp_forward.1} parent=5 // pred_check_branch
        %956 = sbr.rel (%p954) target = $region56
      $region55: #{mlp_forward.1} parent=5 // pred_region
        %s957 = ssub.s32 %s18, 2
        // Predicated region
        $region57: #{mlp_forward.1} parent=55 // pred_check
          %p958 = pneg %p199
        $region58: #{mlp_forward.1} parent=55 // pred_check_branch
          %960 = sbr.rel (%p958) target = $region60
        $region59: #{mlp_forward.1} parent=55 // pred_region
          %s961 = sand.u32 %s184, 1
          %s962 = scalar_lea.sflag [#allocation4], %s961
          %s963 = sand.u32 %s184, 1
          %s964 = scalar_lea.vmem [#allocation3], %s963
          %965 = dma.done %s962, 16
        $region60: #{mlp_forward.1} parent=55 // pred_fallthru
          _
      $region56: #{mlp_forward.1} parent=5 // pred_fallthru
        _
    $region6: #{mlp_forward.1} parent=1 // loop_footer
      %s22 = sadd.s32 1, %s18
    $region7: #{mlp_forward.1} parent=1 // loop_footer_branch
      %17 = sbr.rel target = $region3
    $region8: #{mlp_forward.1} parent=1 // loop_exit
      _
    %966 = vsyncpa [#allocation4], 1
    %s967 = scalar_lea.sflag [#allocation4], 1
    %968 = vsyncpa %s967, 1

</llo_original>
